<compile_context>
chip_gen: v7x
topology: tpu7x:2x2x1
jax: 0.10.0
libtpu: 0.0.40
codegen_flags: <defaults>
</compile_context>

<pallas_src>
import jax
import jax.numpy as jnp
from jax.experimental import pallas as pl
from jax.experimental.pallas import tpu as pltpu


def _round_up(n, m):
    return ((n + m - 1) // m) * m


def agent_kernel(x_ref, w1t_ref, w2t_ref, b2_ref, w3dt_ref, b3d_ref, p1_ref):
    # x_ref: (16, TB) bf16 — sublanes = [x0..x3, 1, 0-pad], lanes = batch.

    # ---- Layer 1 (bias folded into augmented weight): MXU, f32 accumulate ----
    h1 = jnp.dot(w1t_ref[...], x_ref[...],
                 preferred_element_type=jnp.float32)        # (128, TB) f32
    h1 = jnp.maximum(h1, 0.0)

    # ---- Layer 2: MXU matmul (bf16 in / f32 acc) + bias + ReLU on the VPU ----
    h2 = jnp.dot(w2t_ref[...], h1.astype(jnp.bfloat16),
                 preferred_element_type=jnp.float32) + b2_ref[...]
    h2 = jnp.maximum(h2, 0.0)                               # (128, TB) f32

    # ---- Collapsed 2-class head: softmax(2) == sigmoid(logit diff), MXU reduce ----
    d = jnp.dot(w3dt_ref[...], h2.astype(jnp.bfloat16),
                preferred_element_type=jnp.float32) + b3d_ref[...]   # (1, TB)

    # Numerically stable sigmoid: one EUP exp + exact EUP reciprocal.
    z = jnp.exp(-jnp.abs(d))
    inv = pl.reciprocal(1.0 + z, approx=False)
    p1_ref[...] = jnp.where(d >= 0.0, inv, z * inv).astype(p1_ref.dtype)


def agent_forward(x, params, *, tb=1024):
    """x: (B, 4) float32. params: (w1, b1, w2, b2, w3, b3).

    Returns (probs[B, 2] float32, action[B] int32) — same as Agent.forward."""
    w1, b1, w2, b2, w3, b3 = params

    # One-time parameter massaging (plain XLA ops outside the kernel).
    w1_aug = jnp.concatenate(
        [w1, b1.reshape(1, 128), jnp.zeros((11, 128), w1.dtype)], axis=0)  # (16,128)
    w1t = w1_aug.T.astype(jnp.bfloat16)                     # (128, 16)  MXU weight
    w2t = w2.T.astype(jnp.bfloat16)                         # (128, 128) MXU weight
    b2c = b2.reshape(128, 1).astype(jnp.float32)            # (128, 1)   f32 bias
    w3dt = (w3[:, 1] - w3[:, 0]).reshape(1, 128).astype(jnp.bfloat16)  # collapsed head
    b3f = b3.reshape(-1, 2)
    b3d = (b3f[:, 1] - b3f[:, 0]).reshape(1, 1).astype(jnp.float32)

    B = x.shape[0]
    TB = min(tb, _round_up(max(B, 1), 128))                 # batch tile, mult. of 128
    TB = _round_up(TB, 128)
    Bp = _round_up(B, TB)

    # Augment x with a ones column (bias) and zero-pad features to 16, then go
    # feature-major so batch sits on the lane axis (lane-dense input block).
    x_aug = jnp.concatenate(
        [x.astype(jnp.float32),
         jnp.ones((B, 1), jnp.float32),
         jnp.zeros((B, 11), jnp.float32)], axis=1)          # (B, 16)
    if Bp != B:
        x_aug = jnp.pad(x_aug, ((0, Bp - B), (0, 0)))
    xT = x_aug.T.astype(jnp.bfloat16)                       # (16, Bp)

    const = lambda i: (0, 0)                                # weights stay resident

    p1 = pl.pallas_call(
        agent_kernel,
        out_shape=jax.ShapeDtypeStruct((1, Bp), jnp.float32),
        grid=(Bp // TB,),
        in_specs=[
            pl.BlockSpec((16, TB), lambda i: (0, i)),       # x tile (lane-dense)
            pl.BlockSpec((128, 16), const),                 # w1 aug (bf16, bias folded)
            pl.BlockSpec((128, 128), const),                # w2^T (bf16, MXU)
            pl.BlockSpec((128, 1), const),                  # b2 (f32)
            pl.BlockSpec((1, 128), const),                  # collapsed head weight
            pl.BlockSpec((1, 1), const),                    # collapsed head bias
        ],
        out_specs=pl.BlockSpec((1, TB), lambda i: (0, i)),  # lane-dense p1 output
        compiler_params=pltpu.CompilerParams(
            dimension_semantics=("parallel",)),             # v7x: 2 TCs split batch
    )(xT, w1t, w2t, b2c, w3dt, b3d)

    p1 = p1[0, :B]                                          # (B,)
    probs = jnp.stack([1.0 - p1, p1], axis=-1)              # (B, 2)
    action = jnp.argmax(probs, axis=-1).astype(jnp.int32)
    return probs, action


def agent_reference(x, params):
    """Pure-JAX f32 reference of Agent.forward (for correctness check)."""
    w1, b1, w2, b2, w3, b3 = params
    h1 = jnp.maximum(x @ w1 + b1, 0.0)
    h2 = jnp.maximum(h1 @ w2 + b2, 0.0)
    logits = h2 @ w3 + b3
    probs = jax.nn.softmax(logits, axis=-1)
    action = jnp.argmax(probs, axis=-1).astype(jnp.int32)
    return probs, action


def init_params(key):
    """Deterministic init mimicking nn.Linear default: U(-1/sqrt(fan_in), +1/sqrt(fan_in))."""
    ks = jax.random.split(key, 6)

    def lin(kw, kb, fan_in, fan_out):
        bound = 1.0 / jnp.sqrt(jnp.float32(fan_in))
        w = jax.random.uniform(kw, (fan_in, fan_out), jnp.float32, -bound, bound)
        b = jax.random.uniform(kb, (1, fan_out), jnp.float32, -bound, bound)
        return w, b

    w1, b1 = lin(ks[0], ks[1], 4, 128)
    w2, b2 = lin(ks[2], ks[3], 128, 128)
    w3, b3 = lin(ks[4], ks[5], 128, 2)
    return (w1, b1, w2, b2, w3, b3)


if __name__ == "__main__":
    key = jax.random.PRNGKey(0)
    k_params, k_x = jax.random.split(key)

    params = init_params(k_params)
    # Small batch of CartPole-like states: (batch=8, state_dim=4)
    x = jax.random.normal(k_x, (8, 4), dtype=jnp.float32)

    probs, action = agent_forward(x, params)
    jax.block_until_ready((probs, action))

    ref_probs, _ = agent_reference(x, params)

    # Sanity: shapes, rows sum to ~1, action consistent with argmax(probs),
    # and probs close to the f32 reference (loose tol: matmuls are bf16-in).
    assert probs.shape == (8, 2) and action.shape == (8,)
    assert jnp.allclose(jnp.sum(probs, axis=-1), 1.0, atol=1e-5)
    assert jnp.all(action == jnp.argmax(probs, axis=-1))
    assert jnp.allclose(probs, ref_probs, atol=5e-2)

    print("KERNEL_OK")
</pallas_src>

<mosaic_0001>
module attributes {stable_mosaic.version = 11 : i64} {
  func.func @agent_kernel(%arg0: i32, %arg1: memref<16x128xbf16, #tpu.memory_space<vmem>>, %arg2: memref<128x16xbf16, #tpu.memory_space<vmem>>, %arg3: memref<128x128xbf16, #tpu.memory_space<vmem>>, %arg4: memref<128x1xf32, #tpu.memory_space<vmem>>, %arg5: memref<1x128xbf16, #tpu.memory_space<vmem>>, %arg6: memref<1x1xf32, #tpu.memory_space<vmem>>, %arg7: memref<1x128xf32, #tpu.memory_space<vmem>>) attributes {dimension_semantics = [#tpu.dimension_semantics<parallel>], iteration_bounds = array<i64: 1>, scalar_prefetch = 0 : i64, scratch_operands = 0 : i64, tpu.core_type = #tpu.core_type<tc>, window_params = [{transform_indices = @transform_0, window_bounds = array<i64: 16, 128>}, {pipeline_mode = #tpu.pipeline_mode<synchronous>, transform_indices = @transform_1, window_bounds = array<i64: 128, 16>}, {pipeline_mode = #tpu.pipeline_mode<synchronous>, transform_indices = @transform_2, window_bounds = array<i64: 128, 128>}, {pipeline_mode = #tpu.pipeline_mode<synchronous>, transform_indices = @transform_3, window_bounds = array<i64: 128, 1>}, {pipeline_mode = #tpu.pipeline_mode<synchronous>, transform_indices = @transform_4, window_bounds = array<i64: 1, 128>}, {pipeline_mode = #tpu.pipeline_mode<synchronous>, transform_indices = @transform_5, window_bounds = array<i64: 1, 1>}, {transform_indices = @transform_6, window_bounds = array<i64: 1, 128>}]} {
    %c0 = arith.constant 0 : index
    %c0_0 = arith.constant 0 : index
    %0 = vector.load %arg2[%c0, %c0_0] : memref<128x16xbf16, #tpu.memory_space<vmem>>, vector<128x16xbf16>
    %c0_1 = arith.constant 0 : index
    %c0_2 = arith.constant 0 : index
    %1 = vector.load %arg1[%c0_1, %c0_2] : memref<16x128xbf16, #tpu.memory_space<vmem>>, vector<16x128xbf16>
    %cst = arith.constant dense<0.000000e+00> : vector<128x128xf32>
    %2 = tpu.matmul %0, %1, %cst {dimension_numbers = #tpu.dot_dimension_numbers<[1], [0], [0], [1], [0, 0, 1, 1], [], []>} : vector<128x16xbf16>, vector<16x128xbf16>, vector<128x128xf32> -> vector<128x128xf32>
    %cst_3 = arith.constant 0.000000e+00 : f32
    %3 = vector.broadcast %cst_3 : f32 to vector<128x128xf32>
    %4 = arith.maximumf %2, %3 : vector<128x128xf32>
    %c0_4 = arith.constant 0 : index
    %c0_5 = arith.constant 0 : index
    %5 = vector.load %arg3[%c0_4, %c0_5] : memref<128x128xbf16, #tpu.memory_space<vmem>>, vector<128x128xbf16>
    %6 = arith.truncf %4 : vector<128x128xf32> to vector<128x128xbf16>
    %cst_6 = arith.constant dense<0.000000e+00> : vector<128x128xf32>
    %7 = tpu.matmul %5, %6, %cst_6 {dimension_numbers = #tpu.dot_dimension_numbers<[1], [0], [0], [1], [0, 0, 1, 1], [], []>} : vector<128x128xbf16>, vector<128x128xbf16>, vector<128x128xf32> -> vector<128x128xf32>
    %c0_7 = arith.constant 0 : index
    %c0_8 = arith.constant 0 : index
    %8 = vector.load %arg4[%c0_7, %c0_8] : memref<128x1xf32, #tpu.memory_space<vmem>>, vector<128x1xf32>
    %9 = vector.broadcast %8 : vector<128x1xf32> to vector<128x128xf32>
    %10 = arith.addf %7, %9 : vector<128x128xf32>
    %cst_9 = arith.constant 0.000000e+00 : f32
    %11 = vector.broadcast %cst_9 : f32 to vector<128x128xf32>
    %12 = arith.maximumf %10, %11 : vector<128x128xf32>
    %c0_10 = arith.constant 0 : index
    %c0_11 = arith.constant 0 : index
    %13 = vector.load %arg5[%c0_10, %c0_11] : memref<1x128xbf16, #tpu.memory_space<vmem>>, vector<1x128xbf16>
    %14 = arith.truncf %12 : vector<128x128xf32> to vector<128x128xbf16>
    %cst_12 = arith.constant dense<0.000000e+00> : vector<1x128xf32>
    %15 = tpu.matmul %13, %14, %cst_12 {dimension_numbers = #tpu.dot_dimension_numbers<[1], [0], [0], [1], [0, 0, 1, 1], [], []>} : vector<1x128xbf16>, vector<128x128xbf16>, vector<1x128xf32> -> vector<1x128xf32>
    %c0_13 = arith.constant 0 : index
    %c0_14 = arith.constant 0 : index
    %16 = vector.load %arg6[%c0_13, %c0_14] : memref<1x1xf32, #tpu.memory_space<vmem>>, vector<1x1xf32>
    %17 = vector.broadcast %16 : vector<1x1xf32> to vector<1x128xf32>
    %18 = arith.addf %15, %17 : vector<1x128xf32>
    %19 = math.absf %18 : vector<1x128xf32>
    %cst_15 = arith.constant 0.000000e+00 : f32
    %20 = vector.broadcast %cst_15 : f32 to vector<1x128xf32>
    %21 = arith.subf %20, %19 : vector<1x128xf32>
    %22 = math.exp %21 : vector<1x128xf32>
    %cst_16 = arith.constant 1.000000e+00 : f32
    %23 = vector.broadcast %cst_16 : f32 to vector<1x128xf32>
    %24 = arith.addf %23, %22 : vector<1x128xf32>
    %25 = tpu.reciprocal %24 : vector<1x128xf32> -> vector<1x128xf32>
    %cst_17 = arith.constant 0.000000e+00 : f32
    %26 = vector.broadcast %cst_17 : f32 to vector<1x128xf32>
    %27 = arith.cmpf oge, %18, %26 : vector<1x128xf32>
    %28 = arith.mulf %22, %25 : vector<1x128xf32>
    %29 = arith.select %27, %25, %28 : vector<1x128xi1>, vector<1x128xf32>
    %c0_18 = arith.constant 0 : index
    %c0_19 = arith.constant 0 : index
    %30 = vector.load %arg7[%c0_18, %c0_19] : memref<1x128xf32, #tpu.memory_space<vmem>>, vector<1x128xf32>
    tpu.vector_store %arg7[%c0_18, %c0_19], %29 {strides = array<i32>} : memref<1x128xf32, #tpu.memory_space<vmem>>, vector<1x128xf32>,
    return
  }
  func.func @transform_0(%arg0: i32) -> (i32, i32) {
    %c0_i32 = arith.constant 0 : i32
    %c0_i32_0 = arith.constant 0 : i32
    return %c0_i32, %arg0 : i32, i32
  }
  func.func @transform_1(%arg0: i32) -> (i32, i32) {
    %c0_i32 = arith.constant 0 : i32
    %c0_i32_0 = arith.constant 0 : i32
    %c0_i32_1 = arith.constant 0 : i32
    return %c0_i32, %c0_i32_0 : i32, i32
  }
  func.func @transform_2(%arg0: i32) -> (i32, i32) {
    %c0_i32 = arith.constant 0 : i32
    %c0_i32_0 = arith.constant 0 : i32
    %c0_i32_1 = arith.constant 0 : i32
    return %c0_i32, %c0_i32_0 : i32, i32
  }
  func.func @transform_3(%arg0: i32) -> (i32, i32) {
    %c0_i32 = arith.constant 0 : i32
    %c0_i32_0 = arith.constant 0 : i32
    %c0_i32_1 = arith.constant 0 : i32
    return %c0_i32, %c0_i32_0 : i32, i32
  }
  func.func @transform_4(%arg0: i32) -> (i32, i32) {
    %c0_i32 = arith.constant 0 : i32
    %c0_i32_0 = arith.constant 0 : i32
    %c0_i32_1 = arith.constant 0 : i32
    return %c0_i32, %c0_i32_0 : i32, i32
  }
  func.func @transform_5(%arg0: i32) -> (i32, i32) {
    %c0_i32 = arith.constant 0 : i32
    %c0_i32_0 = arith.constant 0 : i32
    %c0_i32_1 = arith.constant 0 : i32
    return %c0_i32, %c0_i32_0 : i32, i32
  }
  func.func @transform_6(%arg0: i32) -> (i32, i32) {
    %c0_i32 = arith.constant 0 : i32
    %c0_i32_0 = arith.constant 0 : i32
    return %c0_i32, %arg0 : i32, i32
  }
}

</mosaic_0001>

<llo_original>
// kernel: tpu_custom_call.1
$region0: #{tpu_custom_call.1}
  #allocation0 [shape = 'u32[]', space=smem, size = 0x4, offset = 0x4, fixed_abs, tag = 'smem constant byte address 0x4 - core index']
  #allocation1 [shape = 'u32[144,128]{1,0:T(1,128)}', space=vmem, size = 0x12000, scoped, tag = 'internal scratch']
  #allocation2 [shape = 'f32[1,1]{1,0:T(1,128)S(1)}', space=vmem, size = 0x200, scoped, tag = 'scoped memory for tpu_custom_call.1']
  %s0 = inlined_call_operand.vmem [shape: bf16[16,128], index: 0, kind: input, shape index: {}]
  %s1 = inlined_call_operand.vmem [shape: bf16[128,16], index: 1, kind: input, shape index: {}]
  %s2 = inlined_call_operand.vmem [shape: bf16[128,128], index: 2, kind: input, shape index: {}]
  %s3 = inlined_call_operand.vmem [shape: f32[128,1], index: 3, kind: input, shape index: {}]
  %s4 = inlined_call_operand.vmem [shape: bf16[1,128], index: 4, kind: input, shape index: {}]
  %s5 = inlined_call_operand.<no memory space> [shape: f32[1,1], index: 5, kind: input, shape index: {}]
  %s6 = inlined_call_operand.hbm [shape: f32[1,128], index: 6, kind: output, shape index: {}]
  %s7 = sld [smem:[#allocation0]]
  $region34: #{tpu_custom_call.1} parent=0
    _
  %s9 = ssub.s32 1, %s7
  %s10 = scalar_select 0, %s9, %s7
  %v11 = vstv %s5
  %12 = vst [vmem:[#allocation2] sm:$0x1] %v11
  $region1: #{tpu_custom_call.1} parent=0
    #allocation3 [shape = 'u8[512]{0}', space=vmem, size = 0x400, scoped, tag = 'output window, operand 0, single buffered']
    #allocation4 [shape = 's32[1]{0}', space=sflag, size = 0x4, scoped, tag = 'scoped memory for tpu_custom_call.1']
    %13 = vsyncpa [#allocation4], 0
    // Predicated region
    $region2: #{tpu_custom_call.1} parent=1 // pred_check
      _
    $region3: #{tpu_custom_call.1} parent=1 // pred_check_branch
      %15 = sbr.rel (0) target = $region5
    $region4: #{tpu_custom_call.1} parent=1 // pred_region
      _
    $region5: #{tpu_custom_call.1} parent=1 // pred_fallthru
      _
    // Predicated region
    $region6: #{tpu_custom_call.1} parent=1 // pred_check
      _
    $region7: #{tpu_custom_call.1} parent=1 // pred_check_branch
      %17 = sbr.rel (0) target = $region9
    $region8: #{tpu_custom_call.1} parent=1 // pred_region
      _
    $region9: #{tpu_custom_call.1} parent=1 // pred_fallthru
      _
    // Predicated region
    $region10: #{tpu_custom_call.1} parent=1 // pred_check
      _
    $region11: #{tpu_custom_call.1} parent=1 // pred_check_branch
      %19 = sbr.rel (0) target = $region13
    $region12: #{tpu_custom_call.1} parent=1 // pred_region
      _
    $region13: #{tpu_custom_call.1} parent=1 // pred_fallthru
      _
    // Predicated region
    $region14: #{tpu_custom_call.1} parent=1 // pred_check
      _
    $region15: #{tpu_custom_call.1} parent=1 // pred_check_branch
      %21 = sbr.rel (0) target = $region17
    $region16: #{tpu_custom_call.1} parent=1 // pred_region
      _
    $region17: #{tpu_custom_call.1} parent=1 // pred_fallthru
      _
    // Predicated region
    $region18: #{tpu_custom_call.1} parent=1 // pred_check
      _
    $region19: #{tpu_custom_call.1} parent=1 // pred_check_branch
      %23 = sbr.rel (0) target = $region21
    $region20: #{tpu_custom_call.1} parent=1 // pred_region
      _
    $region21: #{tpu_custom_call.1} parent=1 // pred_fallthru
      _
    // Predicated region
    $region22: #{tpu_custom_call.1} parent=1 // pred_check
      _
    $region23: #{tpu_custom_call.1} parent=1 // pred_check_branch
      %25 = sbr.rel (0) target = $region25
    $region24: #{tpu_custom_call.1} parent=1 // pred_region
      _
    $region25: #{tpu_custom_call.1} parent=1 // pred_fallthru
      _
    %v27 = vld [vmem:[%s1] sm:$0xf]
    %v28 = vld [vmem:[%s1 + $0x4] sm:$0xf]
    %v29 = vld [vmem:[%s1 + $0x8] sm:$0xf]
    %v30 = vld [vmem:[%s1 + $0xc] sm:$0xf]
    %v31 = vld [vmem:[%s1 + $0x10] sm:$0xf]
    %v32 = vld [vmem:[%s1 + $0x14] sm:$0xf]
    %v33 = vld [vmem:[%s1 + $0x18] sm:$0xf]
    %v34 = vld [vmem:[%s1 + $0x1c] sm:$0xf]
    %v35 = vld [vmem:[%s1 + $0x20] sm:$0xf]
    %v36 = vld [vmem:[%s1 + $0x24] sm:$0xf]
    %v37 = vld [vmem:[%s1 + $0x28] sm:$0xf]
    %v38 = vld [vmem:[%s1 + $0x2c] sm:$0xf]
    %v39 = vld [vmem:[%s1 + $0x30] sm:$0xf]
    %v40 = vld [vmem:[%s1 + $0x34] sm:$0xf]
    %v41 = vld [vmem:[%s1 + $0x38] sm:$0xf]
    %v42 = vld [vmem:[%s1 + $0x3c] sm:$0xf]
    %v43 = vld [vmem:[%s0] sm:$0xf]
    %v44 = vld [vmem:[%s0 + $0x4] sm:$0xf]
    %v61 = vunpack.c.l.b16 %v27
    %v62 = vunpack.c.l.b16 %v28
    %v63 = vunpack.c.l.b16 %v29
    %v64 = vunpack.c.l.b16 %v30
    %v65 = vunpack.c.l.b16 %v31
    %v66 = vunpack.c.l.b16 %v32
    %v67 = vunpack.c.l.b16 %v33
    %v68 = vunpack.c.l.b16 %v34
    %v69 = vunpack.c.l.b16 %v35
    %v70 = vunpack.c.l.b16 %v36
    %v71 = vunpack.c.l.b16 %v37
    %v72 = vunpack.c.l.b16 %v38
    %v73 = vunpack.c.l.b16 %v39
    %v74 = vunpack.c.l.b16 %v40
    %v75 = vunpack.c.l.b16 %v41
    %v76 = vunpack.c.l.b16 %v42
    %v77 = vpack.c.b16 %v62, %v61
    %v78 = vpack.c.b16 %v64, %v63
    %v79 = vpack.c.b16 %v66, %v65
    %v80 = vpack.c.b16 %v68, %v67
    %v81 = vpack.c.b16 %v70, %v69
    %v82 = vpack.c.b16 %v72, %v71
    %v83 = vpack.c.b16 %v74, %v73
    %v84 = vpack.c.b16 %v76, %v75
    %v87 = vunpack.c.l.b16 %v43
    %v88 = vunpack.c.l.b16 %v44
    %v89 = vpack.c.b16 %v88, %v87
    %vm91 = vcmask 130048
    %v93 = vsel %vm91, %v77, 0
    %v96 = vsel %vm91, %v78, 0
    %v99 = vsel %vm91, %v79, 0
    %v102 = vsel %vm91, %v80, 0
    %v105 = vsel %vm91, %v81, 0
    %v108 = vsel %vm91, %v82, 0
    %v111 = vsel %vm91, %v83, 0
    %v114 = vsel %vm91, %v84, 0
    %116 = vmatprep.subr.bf16.mxu0 0
    %117 = vmatpush1.bf16.msra.mxu0 %v89
    %118 = vmatprep.subr.bf16.mxu0 0
    %119 = vmatpush1.bf16.msra.mxu0 0
    %120 = vmatprep.subr.bf16.mxu0 0
    %121 = vmatpush1.bf16.msra.mxu0 0
    %122 = vmatprep.subr.bf16.mxu0 0
    %123 = vmatpush1.bf16.msra.mxu0 0
    %124 = vmatprep.subr.bf16.mxu0 0
    %125 = vmatpush1.bf16.msra.mxu0 0
    %126 = vmatprep.subr.bf16.mxu0 0
    %127 = vmatpush1.bf16.msra.mxu0 0
    %128 = vmatprep.subr.bf16.mxu0 0
    %129 = vmatpush1.bf16.msra.mxu0 0
    %130 = vmatprep.subr.bf16.mxu0 0
    %131 = vmatpush1.bf16.msra.mxu0 0
    %132 = vmatprep.subr.bf16.mxu0 0
    %133 = vmatpush1.bf16.msra.mxu0 0
    %134 = vmatprep.subr.bf16.mxu0 0
    %135 = vmatpush1.bf16.msra.mxu0 0
    %136 = vmatprep.subr.bf16.mxu0 0
    %137 = vmatpush1.bf16.msra.mxu0 0
    %138 = vmatprep.subr.bf16.mxu0 0
    %139 = vmatpush1.bf16.msra.mxu0 0
    %140 = vmatprep.subr.bf16.mxu0 0
    %141 = vmatpush1.bf16.msra.mxu0 0
    %142 = vmatprep.subr.bf16.mxu0 0
    %143 = vmatpush1.bf16.msra.mxu0 0
    %144 = vmatprep.subr.bf16.mxu0 0
    %145 = vmatpush1.bf16.msra.mxu0 0
    %146 = vmatprep.subr.bf16.mxu0 0
    %147 = vmatpush1.bf16.msra.mxu0 0
    %148 = vmatprep.mubr.bf16.mxu0 0
    %149 = vmatmul.mubr.bf16.gmra.mrb[0].mxu0 %v93
    %v150 = vpop.f32.mrb[0].mxu0
    %v151 = vadd.f32 0.0, %v150
    %v152 = vpop.f32.mrb[0].mxu0
    %v153 = vpop.f32.mrb[0].mxu0
    %v154 = vadd.f32 0.0, %v153
    %v155 = vpop.f32.mrb[0].mxu0
    %156 = vmatprep.mubr.bf16.mxu0 0
    %157 = vmatmul.mubr.bf16.gmra.mrb[0].mxu0 %v96
    %v158 = vpop.f32.mrb[0].mxu0
    %v159 = vadd.f32 0.0, %v158
    %v160 = vpop.f32.mrb[0].mxu0
    %v161 = vpop.f32.mrb[0].mxu0
    %v162 = vadd.f32 0.0, %v161
    %v163 = vpop.f32.mrb[0].mxu0
    %164 = vmatprep.mubr.bf16.mxu0 0
    %165 = vmatmul.mubr.bf16.gmra.mrb[0].mxu0 %v99
    %v166 = vpop.f32.mrb[0].mxu0
    %v167 = vadd.f32 0.0, %v166
    %v168 = vpop.f32.mrb[0].mxu0
    %v169 = vpop.f32.mrb[0].mxu0
    %v170 = vadd.f32 0.0, %v169
    %v171 = vpop.f32.mrb[0].mxu0
    %172 = vmatprep.mubr.bf16.mxu0 0
    %173 = vmatmul.mubr.bf16.gmra.mrb[0].mxu0 %v102
    %v174 = vpop.f32.mrb[0].mxu0
    %v175 = vadd.f32 0.0, %v174
    %v176 = vpop.f32.mrb[0].mxu0
    %v177 = vpop.f32.mrb[0].mxu0
    %v178 = vadd.f32 0.0, %v177
    %v179 = vpop.f32.mrb[0].mxu0
    %180 = vmatprep.mubr.bf16.mxu0 0
    %181 = vmatmul.mubr.bf16.gmra.mrb[0].mxu0 %v105
    %v182 = vpop.f32.mrb[0].mxu0
    %v183 = vadd.f32 0.0, %v182
    %v184 = vpop.f32.mrb[0].mxu0
    %v185 = vpop.f32.mrb[0].mxu0
    %v186 = vadd.f32 0.0, %v185
    %v187 = vpop.f32.mrb[0].mxu0
    %188 = vmatprep.mubr.bf16.mxu0 0
    %189 = vmatmul.mubr.bf16.gmra.mrb[0].mxu0 %v108
    %v190 = vpop.f32.mrb[0].mxu0
    %v191 = vadd.f32 0.0, %v190
    %v192 = vpop.f32.mrb[0].mxu0
    %v193 = vpop.f32.mrb[0].mxu0
    %v194 = vadd.f32 0.0, %v193
    %v195 = vpop.f32.mrb[0].mxu0
    %196 = vmatprep.mubr.bf16.mxu0 0
    %197 = vmatmul.mubr.bf16.gmra.mrb[0].mxu0 %v111
    %v198 = vpop.f32.mrb[0].mxu0
    %v199 = vadd.f32 0.0, %v198
    %v200 = vpop.f32.mrb[0].mxu0
    %v201 = vpop.f32.mrb[0].mxu0
    %v202 = vadd.f32 0.0, %v201
    %v203 = vpop.f32.mrb[0].mxu0
    %204 = vmatprep.mubr.bf16.mxu0 0
    %205 = vmatmul.mubr.bf16.gmra.mrb[0].mxu0 %v114
    %v206 = vpop.f32.mrb[0].mxu0
    %v207 = vadd.f32 0.0, %v206
    %v208 = vpop.f32.mrb[0].mxu0
    %v209 = vpop.f32.mrb[0].mxu0
    %v210 = vadd.f32 0.0, %v209
    %v211 = vpop.f32.mrb[0].mxu0
    %212 = vdwg.mxu0
    %v213 = vmax.f32 %v151, 0.0
    %v214 = vmax.f32 %v154, 0.0
    %v215 = vmax.f32 %v159, 0.0
    %v216 = vmax.f32 %v162, 0.0
    %v217 = vmax.f32 %v167, 0.0
    %v218 = vmax.f32 %v170, 0.0
    %v219 = vmax.f32 %v175, 0.0
    %v220 = vmax.f32 %v178, 0.0
    %v221 = vmax.f32 %v183, 0.0
    %v222 = vmax.f32 %v186, 0.0
    %v223 = vmax.f32 %v191, 0.0
    %v224 = vmax.f32 %v194, 0.0
    %v225 = vmax.f32 %v199, 0.0
    %v226 = vmax.f32 %v202, 0.0
    %v227 = vmax.f32 %v207, 0.0
    %v228 = vmax.f32 %v210, 0.0
    %v229 = vld [vmem:[%s2] sm:$0xf]
    %v230 = vld [vmem:[%s2 + $0x4] sm:$0xf]
    %v231 = vld [vmem:[%s2 + $0x8] sm:$0xf]
    %v232 = vld [vmem:[%s2 + $0xc] sm:$0xf]
    %v233 = vld [vmem:[%s2 + $0x10] sm:$0xf]
    %v234 = vld [vmem:[%s2 + $0x14] sm:$0xf]
    %v235 = vld [vmem:[%s2 + $0x18] sm:$0xf]
    %v236 = vld [vmem:[%s2 + $0x1c] sm:$0xf]
    %v237 = vld [vmem:[%s2 + $0x20] sm:$0xf]
    %v238 = vld [vmem:[%s2 + $0x24] sm:$0xf]
    %v239 = vld [vmem:[%s2 + $0x28] sm:$0xf]
    %v240 = vld [vmem:[%s2 + $0x2c] sm:$0xf]
    %v241 = vld [vmem:[%s2 + $0x30] sm:$0xf]
    %v242 = vld [vmem:[%s2 + $0x34] sm:$0xf]
    %v243 = vld [vmem:[%s2 + $0x38] sm:$0xf]
    %v244 = vld [vmem:[%s2 + $0x3c] sm:$0xf]
    %v245 = vpack.c.bf16 %v214, %v213
    %v246 = vpack.c.bf16 %v216, %v215
    %v247 = vpack.c.bf16 %v218, %v217
    %v248 = vpack.c.bf16 %v220, %v219
    %v249 = vpack.c.bf16 %v222, %v221
    %v250 = vpack.c.bf16 %v224, %v223
    %v251 = vpack.c.bf16 %v226, %v225
    %v252 = vpack.c.bf16 %v228, %v227
    %v253 = vld [vmem:[%s3] sm:$0xff]
    %v254 = vld [vmem:[%s3 + $0x8] sm:$0xff]
    %v255 = vld [vmem:[%s3 + $0x10] sm:$0xff]
    %v256 = vld [vmem:[%s3 + $0x18] sm:$0xff]
    %v257 = vld [vmem:[%s3 + $0x20] sm:$0xff]
    %v258 = vld [vmem:[%s3 + $0x28] sm:$0xff]
    %v259 = vld [vmem:[%s3 + $0x30] sm:$0xff]
    %v260 = vld [vmem:[%s3 + $0x38] sm:$0xff]
    %v261 = vld [vmem:[%s3 + $0x40] sm:$0xff]
    %v262 = vld [vmem:[%s3 + $0x48] sm:$0xff]
    %v263 = vld [vmem:[%s3 + $0x50] sm:$0xff]
    %v264 = vld [vmem:[%s3 + $0x58] sm:$0xff]
    %v265 = vld [vmem:[%s3 + $0x60] sm:$0xff]
    %v266 = vld [vmem:[%s3 + $0x68] sm:$0xff]
    %v267 = vld [vmem:[%s3 + $0x70] sm:$0xff]
    %v268 = vld [vmem:[%s3 + $0x78] sm:$0xff]
    %270 = vset.pattern.permute.xlu0 0
    %271 = vperm.xlu0 %270, %v253
    %v272 = vpop.permute.xlu0 %271
    %275 = vset.pattern.permute.xlu0 0
    %276 = vperm.xlu0 %275, %v254
    %v277 = vpop.permute.xlu0 %276
    %280 = vset.pattern.permute.xlu0 0
    %281 = vperm.xlu0 %280, %v255
    %v282 = vpop.permute.xlu0 %281
    %285 = vset.pattern.permute.xlu0 0
    %286 = vperm.xlu0 %285, %v256
    %v287 = vpop.permute.xlu0 %286
    %290 = vset.pattern.permute.xlu0 0
    %291 = vperm.xlu0 %290, %v257
    %v292 = vpop.permute.xlu0 %291
    %295 = vset.pattern.permute.xlu0 0
    %296 = vperm.xlu0 %295, %v258
    %v297 = vpop.permute.xlu0 %296
    %300 = vset.pattern.permute.xlu0 0
    %301 = vperm.xlu0 %300, %v259
    %v302 = vpop.permute.xlu0 %301
    %305 = vset.pattern.permute.xlu0 0
    %306 = vperm.xlu0 %305, %v260
    %v307 = vpop.permute.xlu0 %306
    %310 = vset.pattern.permute.xlu0 0
    %311 = vperm.xlu0 %310, %v261
    %v312 = vpop.permute.xlu0 %311
    %315 = vset.pattern.permute.xlu0 0
    %316 = vperm.xlu0 %315, %v262
    %v317 = vpop.permute.xlu0 %316
    %320 = vset.pattern.permute.xlu0 0
    %321 = vperm.xlu0 %320, %v263
    %v322 = vpop.permute.xlu0 %321
    %325 = vset.pattern.permute.xlu0 0
    %326 = vperm.xlu0 %325, %v264
    %v327 = vpop.permute.xlu0 %326
    %330 = vset.pattern.permute.xlu0 0
    %331 = vperm.xlu0 %330, %v265
    %v332 = vpop.permute.xlu0 %331
    %335 = vset.pattern.permute.xlu0 0
    %336 = vperm.xlu0 %335, %v266
    %v337 = vpop.permute.xlu0 %336
    %340 = vset.pattern.permute.xlu0 0
    %341 = vperm.xlu0 %340, %v267
    %v342 = vpop.permute.xlu0 %341
    %345 = vset.pattern.permute.xlu0 0
    %346 = vperm.xlu0 %345, %v268
    %v347 = vpop.permute.xlu0 %346
    %v365 = vunpack.c.l.b16 %v229
    %v366 = vunpack.c.l.b16 %v230
    %v367 = vunpack.c.l.b16 %v231
    %v368 = vunpack.c.l.b16 %v232
    %v369 = vunpack.c.l.b16 %v233
    %v370 = vunpack.c.l.b16 %v234
    %v371 = vunpack.c.l.b16 %v235
    %v372 = vunpack.c.l.b16 %v236
    %v373 = vunpack.c.l.b16 %v237
    %v374 = vunpack.c.l.b16 %v238
    %v375 = vunpack.c.l.b16 %v239
    %v376 = vunpack.c.l.b16 %v240
    %v377 = vunpack.c.l.b16 %v241
    %v378 = vunpack.c.l.b16 %v242
    %v379 = vunpack.c.l.b16 %v243
    %v380 = vunpack.c.l.b16 %v244
    %v381 = vpack.c.b16 %v366, %v365
    %v382 = vpack.c.b16 %v368, %v367
    %v383 = vpack.c.b16 %v370, %v369
    %v384 = vpack.c.b16 %v372, %v371
    %v385 = vpack.c.b16 %v374, %v373
    %v386 = vpack.c.b16 %v376, %v375
    %v387 = vpack.c.b16 %v378, %v377
    %v388 = vpack.c.b16 %v380, %v379
    %397 = vmatprep.subr.bf16.mxu0 0
    %398 = vmatpush1.bf16.msra.mxu0 %v245
    %399 = vmatprep.subr.bf16.mxu0 0
    %400 = vmatpush1.bf16.msra.mxu0 %v246
    %401 = vmatprep.subr.bf16.mxu0 0
    %402 = vmatpush1.bf16.msra.mxu0 %v247
    %403 = vmatprep.subr.bf16.mxu0 0
    %404 = vmatpush1.bf16.msra.mxu0 %v248
    %405 = vmatprep.subr.bf16.mxu0 0
    %406 = vmatpush1.bf16.msra.mxu0 %v249
    %407 = vmatprep.subr.bf16.mxu0 0
    %408 = vmatpush1.bf16.msra.mxu0 %v250
    %409 = vmatprep.subr.bf16.mxu0 0
    %410 = vmatpush1.bf16.msra.mxu0 %v251
    %411 = vmatprep.subr.bf16.mxu0 0
    %412 = vmatpush1.bf16.msra.mxu0 %v252
    %413 = vmatprep.subr.bf16.mxu0 0
    %414 = vmatpush1.bf16.msra.mxu0 0
    %415 = vmatprep.subr.bf16.mxu0 0
    %416 = vmatpush1.bf16.msra.mxu0 0
    %417 = vmatprep.subr.bf16.mxu0 0
    %418 = vmatpush1.bf16.msra.mxu0 0
    %419 = vmatprep.subr.bf16.mxu0 0
    %420 = vmatpush1.bf16.msra.mxu0 0
    %421 = vmatprep.subr.bf16.mxu0 0
    %422 = vmatpush1.bf16.msra.mxu0 0
    %423 = vmatprep.subr.bf16.mxu0 0
    %424 = vmatpush1.bf16.msra.mxu0 0
    %425 = vmatprep.subr.bf16.mxu0 0
    %426 = vmatpush1.bf16.msra.mxu0 0
    %427 = vmatprep.subr.bf16.mxu0 0
    %428 = vmatpush1.bf16.msra.mxu0 0
    %429 = vmatprep.mubr.bf16.mxu0 0
    %430 = vmatmul.mubr.bf16.gmra.mrb[0].mxu0 %v381
    %v431 = vpop.f32.mrb[0].mxu0
    %v432 = vadd.f32 %v272, %v431
    %v433 = vpop.f32.mrb[0].mxu0
    %v434 = vpop.f32.mrb[0].mxu0
    %v435 = vadd.f32 %v277, %v434
    %v436 = vpop.f32.mrb[0].mxu0
    %437 = vmatprep.mubr.bf16.mxu0 0
    %438 = vmatmul.mubr.bf16.gmra.mrb[0].mxu0 %v382
    %v439 = vpop.f32.mrb[0].mxu0
    %v440 = vadd.f32 %v282, %v439
    %v441 = vpop.f32.mrb[0].mxu0
    %v442 = vpop.f32.mrb[0].mxu0
    %v443 = vadd.f32 %v287, %v442
    %v444 = vpop.f32.mrb[0].mxu0
    %445 = vmatprep.mubr.bf16.mxu0 0
    %446 = vmatmul.mubr.bf16.gmra.mrb[0].mxu0 %v383
    %v447 = vpop.f32.mrb[0].mxu0
    %v448 = vadd.f32 %v292, %v447
    %v449 = vpop.f32.mrb[0].mxu0
    %v450 = vpop.f32.mrb[0].mxu0
    %v451 = vadd.f32 %v297, %v450
    %v452 = vpop.f32.mrb[0].mxu0
    %453 = vmatprep.mubr.bf16.mxu0 0
    %454 = vmatmul.mubr.bf16.gmra.mrb[0].mxu0 %v384
    %v455 = vpop.f32.mrb[0].mxu0
    %v456 = vadd.f32 %v302, %v455
    %v457 = vpop.f32.mrb[0].mxu0
    %v458 = vpop.f32.mrb[0].mxu0
    %v459 = vadd.f32 %v307, %v458
    %v460 = vpop.f32.mrb[0].mxu0
    %461 = vmatprep.mubr.bf16.mxu0 0
    %462 = vmatmul.mubr.bf16.gmra.mrb[0].mxu0 %v385
    %v463 = vpop.f32.mrb[0].mxu0
    %v464 = vadd.f32 %v312, %v463
    %v465 = vpop.f32.mrb[0].mxu0
    %v466 = vpop.f32.mrb[0].mxu0
    %v467 = vadd.f32 %v317, %v466
    %v468 = vpop.f32.mrb[0].mxu0
    %469 = vmatprep.mubr.bf16.mxu0 0
    %470 = vmatmul.mubr.bf16.gmra.mrb[0].mxu0 %v386
    %v471 = vpop.f32.mrb[0].mxu0
    %v472 = vadd.f32 %v322, %v471
    %v473 = vpop.f32.mrb[0].mxu0
    %v474 = vpop.f32.mrb[0].mxu0
    %v475 = vadd.f32 %v327, %v474
    %v476 = vpop.f32.mrb[0].mxu0
    %477 = vmatprep.mubr.bf16.mxu0 0
    %478 = vmatmul.mubr.bf16.gmra.mrb[0].mxu0 %v387
    %v479 = vpop.f32.mrb[0].mxu0
    %v480 = vadd.f32 %v332, %v479
    %v481 = vpop.f32.mrb[0].mxu0
    %v482 = vpop.f32.mrb[0].mxu0
    %v483 = vadd.f32 %v337, %v482
    %v484 = vpop.f32.mrb[0].mxu0
    %485 = vmatprep.mubr.bf16.mxu0 0
    %486 = vmatmul.mubr.bf16.gmra.mrb[0].mxu0 %v388
    %v487 = vpop.f32.mrb[0].mxu0
    %v488 = vadd.f32 %v342, %v487
    %v489 = vpop.f32.mrb[0].mxu0
    %v490 = vpop.f32.mrb[0].mxu0
    %v491 = vadd.f32 %v347, %v490
    %v492 = vpop.f32.mrb[0].mxu0
    %493 = vdwg.mxu0
    %v494 = vmax.f32 %v432, 0.0
    %v495 = vmax.f32 %v435, 0.0
    %v496 = vmax.f32 %v440, 0.0
    %v497 = vmax.f32 %v443, 0.0
    %v498 = vmax.f32 %v448, 0.0
    %v499 = vmax.f32 %v451, 0.0
    %v500 = vmax.f32 %v456, 0.0
    %v501 = vmax.f32 %v459, 0.0
    %v502 = vmax.f32 %v464, 0.0
    %v503 = vmax.f32 %v467, 0.0
    %v504 = vmax.f32 %v472, 0.0
    %v505 = vmax.f32 %v475, 0.0
    %v506 = vmax.f32 %v480, 0.0
    %v507 = vmax.f32 %v483, 0.0
    %v508 = vmax.f32 %v488, 0.0
    %v509 = vmax.f32 %v491, 0.0
    %v510 = vld [vmem:[%s4] sm:$0x1]
    %v511 = vpack.c.bf16 %v495, %v494
    %v512 = vpack.c.bf16 %v497, %v496
    %v513 = vpack.c.bf16 %v499, %v498
    %v514 = vpack.c.bf16 %v501, %v500
    %v515 = vpack.c.bf16 %v503, %v502
    %v516 = vpack.c.bf16 %v505, %v504
    %v517 = vpack.c.bf16 %v507, %v506
    %v518 = vpack.c.bf16 %v509, %v508
    %v519 = vld [vmem:[#allocation2] sm:$0x1]
    %521 = vset.pattern.permute.xlu0 0
    %522 = vperm.xlu0 %521, %v519
    %v523 = vpop.permute.xlu0 %522
    %v525 = vlaneseq
    %v526 = vshrl.u32 %v525, 7
    %v527 = vsub.s32 0, %v526
    %v528 = vrot.slane %v523, %v527
    %529 = vmatprep.subr.bf16.mxu0 0
    %530 = vmatpush1.bf16.msra.mxu0 %v511
    %531 = vmatprep.subr.bf16.mxu0 0
    %532 = vmatpush1.bf16.msra.mxu0 %v512
    %533 = vmatprep.subr.bf16.mxu0 0
    %534 = vmatpush1.bf16.msra.mxu0 %v513
    %535 = vmatprep.subr.bf16.mxu0 0
    %536 = vmatpush1.bf16.msra.mxu0 %v514
    %537 = vmatprep.subr.bf16.mxu0 0
    %538 = vmatpush1.bf16.msra.mxu0 %v515
    %539 = vmatprep.subr.bf16.mxu0 0
    %540 = vmatpush1.bf16.msra.mxu0 %v516
    %541 = vmatprep.subr.bf16.mxu0 0
    %542 = vmatpush1.bf16.msra.mxu0 %v517
    %543 = vmatprep.subr.bf16.mxu0 0
    %544 = vmatpush1.bf16.msra.mxu0 %v518
    %545 = vmatprep.subr.bf16.mxu0 0
    %546 = vmatpush1.bf16.msra.mxu0 0
    %547 = vmatprep.subr.bf16.mxu0 0
    %548 = vmatpush1.bf16.msra.mxu0 0
    %549 = vmatprep.subr.bf16.mxu0 0
    %550 = vmatpush1.bf16.msra.mxu0 0
    %551 = vmatprep.subr.bf16.mxu0 0
    %552 = vmatpush1.bf16.msra.mxu0 0
    %553 = vmatprep.subr.bf16.mxu0 0
    %554 = vmatpush1.bf16.msra.mxu0 0
    %555 = vmatprep.subr.bf16.mxu0 0
    %556 = vmatpush1.bf16.msra.mxu0 0
    %557 = vmatprep.subr.bf16.mxu0 0
    %558 = vmatpush1.bf16.msra.mxu0 0
    %559 = vmatprep.subr.bf16.mxu0 0
    %560 = vmatpush1.bf16.msra.mxu0 0
    %561 = vmatprep.mubr.bf16.mxu0 0
    %562 = vmatmul.mubr.bf16.gmra.mrb[0].mxu0 %v510
    %v563 = vpop.f32.mrb[0].mxu0
    %v564 = vadd.f32 %v528, %v563
    %v565 = vpop.f32.mrb[0].mxu0
    %v566 = vpop.f32.mrb[0].mxu0
    %v567 = vpop.f32.mrb[0].mxu0
    %568 = vdwg.mxu0
    %v569 = vand.u32 2147483647, %v564
    %v570 = vsub.f32 0.0, %v569
    %v571 = vmul.f32 %v570, 1.442695
    %v572 = vpow.pop %v571
    %v573 = vadd.f32 %v572, 1.0
    %v574 = vrcp.pop %v573
    %vm575 = vcmp.ge.f32.partialorder %v564, 0.0
    %v576 = vmul.f32 %v572, %v574
    %v577 = vsel %vm575, %v574, %v576
    %578 = vst [vmem:[#allocation3] sm:$0x1] %v577
    // Predicated region
    $region26: #{tpu_custom_call.1} parent=1 // pred_check
      _
    $region27: #{tpu_custom_call.1} parent=1 // pred_check_branch
      %580 = sbr.rel (0) target = $region29
    $region28: #{tpu_custom_call.1} parent=1 // pred_region
      %s582 = ssub.s32 16, 16
      %583 = vsyncadd [#allocation4], %s582
      %s585 = sshll.u32 [#allocation3], 4
      %s586 = int_to_ptr.vmem [resolvable:$true] %s585
      %588 = dma.vmem_to_hbm [thread:$0]  %s586, 16, %s6, [#allocation4]
    $region29: #{tpu_custom_call.1} parent=1 // pred_fallthru
      _
    // Predicated region
    $region30: #{tpu_custom_call.1} parent=1 // pred_check
      _
    $region31: #{tpu_custom_call.1} parent=1 // pred_check_branch
      %590 = sbr.rel (0) target = $region33
    $region32: #{tpu_custom_call.1} parent=1 // pred_region
      %591 = dma.done [#allocation4], 16
    $region33: #{tpu_custom_call.1} parent=1 // pred_fallthru
      _
    %592 = vsyncpa [#allocation4], 1

</llo_original>
